<compile_context>
chip_gen: v5e
topology: v5e:2x2
jax: 0.10.0
libtpu: 0.0.40
codegen_flags: <defaults>
</compile_context>

<pallas_src>
import jax
import jax.numpy as jnp
from jax.experimental import pallas as pl
from jax.experimental.pallas import tpu as pltpu


def classifier_head_kernel(x_ref, w1_ref, b1_ref, w2_ref, b2_ref, o_ref):
    # x_ref: [TB, H] CLS rows in the operand dtype (f32 or bf16).
    x = x_ref[...]

    # Dropout(0.05) at inference = identity.
    # Linear 1: x @ W1 + b1   (W1 is [in, out]; MXU, f32 accumulation).
    z = jnp.dot(x, w1_ref[...], preferred_element_type=jnp.float32) + b1_ref[...]

    # Mish: z * tanh(softplus(z)).  Numerically stable softplus
    # (matches PyTorch's threshold-20 softplus to float precision).
    sp = jnp.maximum(z, 0.0) + jnp.log1p(jnp.exp(-jnp.abs(z)))
    m = z * jnp.tanh(sp)

    # Dropout identity; Linear 2 into a lane-dense (128-padded) output.
    out = jnp.dot(m.astype(w2_ref.dtype), w2_ref[...],
                  preferred_element_type=jnp.float32) + b2_ref[...]
    o_ref[...] = out.astype(o_ref.dtype)


def polberta_sentiment_head(hidden_states, w1_t, b1, w2_t, b2, *, batch_tile=256):
    """Classifier head of PolBERTaSentimentModel.

    hidden_states: [B, S, H] (f32 or bf16)  -- RoBERTa encoder output.
    w1_t: [H, H], w2_t: [H, n_classes]      -- pre-transposed ([in, out]).
    b1:   [1, H], b2: [1, n_classes]
    Returns [B, n_classes] f32 logits.
    """
    B, S, H = hidden_states.shape
    n_classes = w2_t.shape[1]

    # CLS slice in the wrapper: only [B, H] bytes ever enter VMEM.
    cls = hidden_states[:, 0, :]

    # Lane-dense output: pad n_classes up to a multiple of 128.
    n_pad = max(128, ((n_classes + 127) // 128) * 128)
    if n_pad != n_classes:
        w2_p = jnp.pad(w2_t, ((0, 0), (0, n_pad - n_classes)))
        b2_p = jnp.pad(b2.astype(jnp.float32), ((0, 0), (0, n_pad - n_classes)))
    else:
        w2_p, b2_p = w2_t, b2.astype(jnp.float32)

    # Batch tiling: full B when it fits in one tile, otherwise batch_tile-row
    # tiles (multiple of 8 sublanes, fills MXU rows).  A partial last tile is
    # handled by Pallas' masked boundary writes.
    tb = B if B <= batch_tile else batch_tile
    grid = (pl.cdiv(B, tb),)

    out_padded = pl.pallas_call(
        classifier_head_kernel,
        out_shape=jax.ShapeDtypeStruct((B, n_pad), jnp.float32),
        grid=grid,
        in_specs=[
            pl.BlockSpec((tb, H), lambda i: (i, 0)),      # CLS rows, tiled on B
            pl.BlockSpec((H, H), lambda i: (0, 0)),       # W1, VMEM-resident
            pl.BlockSpec((1, H), lambda i: (0, 0)),       # b1
            pl.BlockSpec((H, n_pad), lambda i: (0, 0)),   # W2 (padded), resident
            pl.BlockSpec((1, n_pad), lambda i: (0, 0)),   # b2 (padded)
        ],
        out_specs=pl.BlockSpec((tb, n_pad), lambda i: (i, 0)),
        compiler_params=pltpu.CompilerParams(
            dimension_semantics=("parallel",)),
    )(cls, w1_t, b1.astype(jnp.float32), w2_p, b2_p)

    return out_padded[:, :n_classes]


def _reference(hidden_states, w1_t, b1, w2_t, b2):
    x = hidden_states[:, 0, :].astype(jnp.float32)
    z = x @ w1_t.astype(jnp.float32) + b1.astype(jnp.float32)
    sp = jnp.maximum(z, 0.0) + jnp.log1p(jnp.exp(-jnp.abs(z)))
    m = z * jnp.tanh(sp)
    return m @ w2_t.astype(jnp.float32) + b2.astype(jnp.float32)


if __name__ == "__main__":
    # Small shapes consistent with the module's forward:
    #   batch=2, seq=8, hidden (base_model_output_size)=128, n_classes=3
    B, S, H, n_classes = 2, 8, 128, 3

    key = jax.random.PRNGKey(0)
    k_hs, k_w1, k_w2 = jax.random.split(key, 3)

    # Synthetic base_model output (would come from the RoBERTa encoder).
    hidden_states = jax.random.normal(k_hs, (B, S, H), dtype=jnp.float32)

    # Init matching the module: Linear weights ~ N(0, 0.02), biases zero.
    # PyTorch Linear stores [out, in]; transpose to [in, out] for the MXU.
    w1 = 0.02 * jax.random.normal(k_w1, (H, H), dtype=jnp.float32)          # [out, in]
    b1 = jnp.zeros((1, H), dtype=jnp.float32)
    w2 = 0.02 * jax.random.normal(k_w2, (n_classes, H), dtype=jnp.float32)  # [out, in]
    b2 = jnp.zeros((1, n_classes), dtype=jnp.float32)
    w1_t, w2_t = w1.T, w2.T

    ref = _reference(hidden_states, w1_t, b1, w2_t, b2)

    # f32 path.
    out_f32 = polberta_sentiment_head(hidden_states, w1_t, b1, w2_t, b2)
    out_f32 = jax.block_until_ready(out_f32)
    assert out_f32.shape == (B, n_classes)
    assert jnp.allclose(out_f32, ref, atol=1e-4, rtol=1e-4)

    # bf16 MXU-operand path (activations + weights bf16, f32 accumulation).
    out_bf16 = polberta_sentiment_head(
        hidden_states.astype(jnp.bfloat16),
        w1_t.astype(jnp.bfloat16), b1,
        w2_t.astype(jnp.bfloat16), b2)
    out_bf16 = jax.block_until_ready(out_bf16)
    assert out_bf16.shape == (B, n_classes)
    assert jnp.allclose(out_bf16, ref, atol=2e-2, rtol=2e-2)

    print("KERNEL_OK")
</pallas_src>

<mosaic_0001>
module attributes {stable_mosaic.version = 11 : i64} {
  func.func @classifier_head_kernel(%arg0: i32, %arg1: memref<2x128xf32, #tpu.memory_space<vmem>>, %arg2: memref<128x128xf32, #tpu.memory_space<vmem>>, %arg3: memref<1x128xf32, #tpu.memory_space<vmem>>, %arg4: memref<128x128xf32, #tpu.memory_space<vmem>>, %arg5: memref<1x128xf32, #tpu.memory_space<vmem>>, %arg6: memref<2x128xf32, #tpu.memory_space<vmem>>) attributes {dimension_semantics = [#tpu.dimension_semantics<parallel>], iteration_bounds = array<i64: 1>, scalar_prefetch = 0 : i64, scratch_operands = 0 : i64, tpu.core_type = #tpu.core_type<tc>, window_params = [{transform_indices = @transform_0, window_bounds = array<i64: 2, 128>}, {pipeline_mode = #tpu.pipeline_mode<synchronous>, transform_indices = @transform_1, window_bounds = array<i64: 128, 128>}, {pipeline_mode = #tpu.pipeline_mode<synchronous>, transform_indices = @transform_2, window_bounds = array<i64: 1, 128>}, {pipeline_mode = #tpu.pipeline_mode<synchronous>, transform_indices = @transform_3, window_bounds = array<i64: 128, 128>}, {pipeline_mode = #tpu.pipeline_mode<synchronous>, transform_indices = @transform_4, window_bounds = array<i64: 1, 128>}, {transform_indices = @transform_5, window_bounds = array<i64: 2, 128>}]} {
    %c0 = arith.constant 0 : index
    %c0_0 = arith.constant 0 : index
    %0 = vector.load %arg1[%c0, %c0_0] : memref<2x128xf32, #tpu.memory_space<vmem>>, vector<2x128xf32>
    %c0_1 = arith.constant 0 : index
    %c0_2 = arith.constant 0 : index
    %1 = vector.load %arg2[%c0_1, %c0_2] : memref<128x128xf32, #tpu.memory_space<vmem>>, vector<128x128xf32>
    %cst = arith.constant dense<0.000000e+00> : vector<2x128xf32>
    %2 = tpu.matmul %0, %1, %cst {dimension_numbers = #tpu.dot_dimension_numbers<[1], [0], [0], [1], [0, 0, 1, 1], [], []>} : vector<2x128xf32>, vector<128x128xf32>, vector<2x128xf32> -> vector<2x128xf32>
    %c0_3 = arith.constant 0 : index
    %c0_4 = arith.constant 0 : index
    %3 = vector.load %arg3[%c0_3, %c0_4] : memref<1x128xf32, #tpu.memory_space<vmem>>, vector<1x128xf32>
    %4 = vector.broadcast %3 : vector<1x128xf32> to vector<2x128xf32>
    %5 = arith.addf %2, %4 : vector<2x128xf32>
    %cst_5 = arith.constant 0.000000e+00 : f32
    %6 = vector.broadcast %cst_5 : f32 to vector<2x128xf32>
    %7 = arith.maximumf %5, %6 : vector<2x128xf32>
    %8 = math.absf %5 : vector<2x128xf32>
    %cst_6 = arith.constant 0.000000e+00 : f32
    %9 = vector.broadcast %cst_6 : f32 to vector<2x128xf32>
    %10 = arith.subf %9, %8 : vector<2x128xf32>
    %11 = math.exp %10 : vector<2x128xf32>
    %12 = math.log1p %11 : vector<2x128xf32>
    %13 = arith.addf %7, %12 : vector<2x128xf32>
    %14 = math.tanh %13 : vector<2x128xf32>
    %15 = arith.mulf %5, %14 : vector<2x128xf32>
    %c0_7 = arith.constant 0 : index
    %c0_8 = arith.constant 0 : index
    %16 = vector.load %arg4[%c0_7, %c0_8] : memref<128x128xf32, #tpu.memory_space<vmem>>, vector<128x128xf32>
    %cst_9 = arith.constant dense<0.000000e+00> : vector<2x128xf32>
    %17 = tpu.matmul %15, %16, %cst_9 {dimension_numbers = #tpu.dot_dimension_numbers<[1], [0], [0], [1], [0, 0, 1, 1], [], []>} : vector<2x128xf32>, vector<128x128xf32>, vector<2x128xf32> -> vector<2x128xf32>
    %c0_10 = arith.constant 0 : index
    %c0_11 = arith.constant 0 : index
    %18 = vector.load %arg5[%c0_10, %c0_11] : memref<1x128xf32, #tpu.memory_space<vmem>>, vector<1x128xf32>
    %19 = vector.broadcast %18 : vector<1x128xf32> to vector<2x128xf32>
    %20 = arith.addf %17, %19 : vector<2x128xf32>
    %c0_12 = arith.constant 0 : index
    %c0_13 = arith.constant 0 : index
    %21 = vector.load %arg6[%c0_12, %c0_13] : memref<2x128xf32, #tpu.memory_space<vmem>>, vector<2x128xf32>
    tpu.vector_store %arg6[%c0_12, %c0_13], %20 {strides = array<i32>} : memref<2x128xf32, #tpu.memory_space<vmem>>, vector<2x128xf32>,
    return
  }
  func.func @transform_0(%arg0: i32) -> (i32, i32) {
    %c0_i32 = arith.constant 0 : i32
    %c0_i32_0 = arith.constant 0 : i32
    return %arg0, %c0_i32 : i32, i32
  }
  func.func @transform_1(%arg0: i32) -> (i32, i32) {
    %c0_i32 = arith.constant 0 : i32
    %c0_i32_0 = arith.constant 0 : i32
    %c0_i32_1 = arith.constant 0 : i32
    return %c0_i32, %c0_i32_0 : i32, i32
  }
  func.func @transform_2(%arg0: i32) -> (i32, i32) {
    %c0_i32 = arith.constant 0 : i32
    %c0_i32_0 = arith.constant 0 : i32
    %c0_i32_1 = arith.constant 0 : i32
    return %c0_i32, %c0_i32_0 : i32, i32
  }
  func.func @transform_3(%arg0: i32) -> (i32, i32) {
    %c0_i32 = arith.constant 0 : i32
    %c0_i32_0 = arith.constant 0 : i32
    %c0_i32_1 = arith.constant 0 : i32
    return %c0_i32, %c0_i32_0 : i32, i32
  }
  func.func @transform_4(%arg0: i32) -> (i32, i32) {
    %c0_i32 = arith.constant 0 : i32
    %c0_i32_0 = arith.constant 0 : i32
    %c0_i32_1 = arith.constant 0 : i32
    return %c0_i32, %c0_i32_0 : i32, i32
  }
  func.func @transform_5(%arg0: i32) -> (i32, i32) {
    %c0_i32 = arith.constant 0 : i32
    %c0_i32_0 = arith.constant 0 : i32
    return %arg0, %c0_i32 : i32, i32
  }
}

</mosaic_0001>

<llo_original>
// kernel: tpu_custom_call.1
$region0: #{tpu_custom_call.1}
  #allocation0 [shape = 'u32[]', space=smem, size = 0x4, offset = 0x4, fixed_abs, tag = 'smem constant byte address 0x4 - core index']
  #allocation1 [shape = 'u32[72,128]{1,0:T(1,128)}', space=vmem, size = 0x9000, scoped, tag = 'internal scratch']
  %s0 = inlined_call_operand.hbm [shape: f32[2,128], index: 0, kind: input, shape index: {}]
  %s1 = inlined_call_operand.hbm [shape: f32[128,128], index: 1, kind: input, shape index: {}]
  %s2 = inlined_call_operand.vmem [shape: f32[1,128], index: 2, kind: input, shape index: {}]
  %s3 = inlined_call_operand.hbm [shape: f32[128,128], index: 3, kind: input, shape index: {}]
  %s4 = inlined_call_operand.vmem [shape: f32[1,128], index: 4, kind: input, shape index: {}]
  %s5 = inlined_call_operand.hbm [shape: f32[2,128], index: 5, kind: output, shape index: {}]
  %s6 = sld [smem:[#allocation0]]
  $region42: #{tpu_custom_call.1} parent=0
    _
  %s8 = ssub.s32 1, %s6
  %s9 = scalar_select 0, %s8, %s6
  $region1: #{tpu_custom_call.1} parent=0
    #allocation2 [shape = 'u8[1024]{0}', space=vmem, size = 0x400, scoped, tag = 'input window, operand 0, single buffered']
    #allocation3 [shape = 's32[1]{0}', space=sflag, size = 0x4, scoped, tag = 'scoped memory for tpu_custom_call.1']
    #allocation4 [shape = 's32[1]{0}', space=sflag, size = 0x4, scoped, tag = 'scoped memory for tpu_custom_call.1']
    #allocation5 [shape = 'u8[65536]{0}', space=vmem, size = 0x10000, scoped, tag = 'input window, operand 1, single buffered']
    #allocation6 [shape = 's32[1]{0}', space=sflag, size = 0x4, scoped, tag = 'scoped memory for tpu_custom_call.1']
    #allocation7 [shape = 'u8[65536]{0}', space=vmem, size = 0x10000, scoped, tag = 'input window, operand 3, single buffered']
    #allocation8 [shape = 'u8[1024]{0}', space=vmem, size = 0x400, scoped, tag = 'output window, operand 0, single buffered']
    %10 = vsyncpa [#allocation3], 0
    %11 = vsyncpa [#allocation6], 0
    %12 = vsyncpa [#allocation4], 0
    // Predicated region
    $region2: #{tpu_custom_call.1} parent=1 // pred_check
      _
    $region3: #{tpu_custom_call.1} parent=1 // pred_check_branch
      %14 = sbr.rel (0) target = $region5
    $region4: #{tpu_custom_call.1} parent=1 // pred_region
      %16 = vsyncadd [#allocation3], 0
      %s18 = sshll.u32 %s0, 4
      %s19 = int_to_ptr.hbm [resolvable:$true] %s18
      %s20 = sshll.u32 [#allocation2], 4
      %s21 = int_to_ptr.vmem [resolvable:$true] %s20
      %23 = dma.hbm_to_vmem [thread:$0]  %s19, 32, %s21, [#allocation3]
    $region5: #{tpu_custom_call.1} parent=1 // pred_fallthru
      _
    // Predicated region
    $region6: #{tpu_custom_call.1} parent=1 // pred_check
      _
    $region7: #{tpu_custom_call.1} parent=1 // pred_check_branch
      %25 = sbr.rel (0) target = $region9
    $region8: #{tpu_custom_call.1} parent=1 // pred_region
      %27 = vsyncadd [#allocation6], 0
      %s28 = sshll.u32 %s1, 4
      %s29 = int_to_ptr.hbm [resolvable:$true] %s28
      %s30 = sshll.u32 [#allocation5], 4
      %s31 = int_to_ptr.vmem [resolvable:$true] %s30
      %36 = dma.hbm_to_vmem [thread:$0]  %s29, 2048, %s31, [#allocation6], 128, 128, 8
    $region9: #{tpu_custom_call.1} parent=1 // pred_fallthru
      _
    // Predicated region
    $region10: #{tpu_custom_call.1} parent=1 // pred_check
      _
    $region11: #{tpu_custom_call.1} parent=1 // pred_check_branch
      %38 = sbr.rel (0) target = $region13
    $region12: #{tpu_custom_call.1} parent=1 // pred_region
      _
    $region13: #{tpu_custom_call.1} parent=1 // pred_fallthru
      _
    // Predicated region
    $region14: #{tpu_custom_call.1} parent=1 // pred_check
      _
    $region15: #{tpu_custom_call.1} parent=1 // pred_check_branch
      %40 = sbr.rel (0) target = $region17
    $region16: #{tpu_custom_call.1} parent=1 // pred_region
      %42 = vsyncadd [#allocation6], 0
      %s43 = sshll.u32 %s3, 4
      %s44 = int_to_ptr.hbm [resolvable:$true] %s43
      %s45 = sshll.u32 [#allocation7], 4
      %s46 = int_to_ptr.vmem [resolvable:$true] %s45
      %51 = dma.hbm_to_vmem [thread:$0]  %s44, 2048, %s46, [#allocation6], 128, 128, 8
    $region17: #{tpu_custom_call.1} parent=1 // pred_fallthru
      _
    // Predicated region
    $region18: #{tpu_custom_call.1} parent=1 // pred_check
      _
    $region19: #{tpu_custom_call.1} parent=1 // pred_check_branch
      %53 = sbr.rel (0) target = $region21
    $region20: #{tpu_custom_call.1} parent=1 // pred_region
      _
    $region21: #{tpu_custom_call.1} parent=1 // pred_fallthru
      _
    // Predicated region
    $region22: #{tpu_custom_call.1} parent=1 // pred_check
      _
    $region23: #{tpu_custom_call.1} parent=1 // pred_check_branch
      %55 = sbr.rel (0) target = $region25
    $region24: #{tpu_custom_call.1} parent=1 // pred_region
      %57 = dma.done [#allocation3], 32
    $region25: #{tpu_custom_call.1} parent=1 // pred_fallthru
      _
    // Predicated region
    $region26: #{tpu_custom_call.1} parent=1 // pred_check
      _
    $region27: #{tpu_custom_call.1} parent=1 // pred_check_branch
      %59 = sbr.rel (0) target = $region29
    $region28: #{tpu_custom_call.1} parent=1 // pred_region
      %61 = dma.done [#allocation6], 2048
    $region29: #{tpu_custom_call.1} parent=1 // pred_fallthru
      _
    // Predicated region
    $region30: #{tpu_custom_call.1} parent=1 // pred_check
      _
    $region31: #{tpu_custom_call.1} parent=1 // pred_check_branch
      %63 = sbr.rel (0) target = $region33
    $region32: #{tpu_custom_call.1} parent=1 // pred_region
      %65 = dma.done [#allocation6], 2048
    $region33: #{tpu_custom_call.1} parent=1 // pred_fallthru
      _
    %v66 = vld [vmem:[#allocation2] sm:$0x3]
    %v67 = vld [vmem:[#allocation5] sm:$0xff]
    %v68 = vld [vmem:[#allocation5 + $0x8] sm:$0xff]
    %v69 = vld [vmem:[#allocation5 + $0x10] sm:$0xff]
    %v70 = vld [vmem:[#allocation5 + $0x18] sm:$0xff]
    %v71 = vld [vmem:[#allocation5 + $0x20] sm:$0xff]
    %v72 = vld [vmem:[#allocation5 + $0x28] sm:$0xff]
    %v73 = vld [vmem:[#allocation5 + $0x30] sm:$0xff]
    %v74 = vld [vmem:[#allocation5 + $0x38] sm:$0xff]
    %v75 = vld [vmem:[#allocation5 + $0x40] sm:$0xff]
    %v76 = vld [vmem:[#allocation5 + $0x48] sm:$0xff]
    %v77 = vld [vmem:[#allocation5 + $0x50] sm:$0xff]
    %v78 = vld [vmem:[#allocation5 + $0x58] sm:$0xff]
    %v79 = vld [vmem:[#allocation5 + $0x60] sm:$0xff]
    %v80 = vld [vmem:[#allocation5 + $0x68] sm:$0xff]
    %v81 = vld [vmem:[#allocation5 + $0x70] sm:$0xff]
    %v82 = vld [vmem:[#allocation5 + $0x78] sm:$0xff]
    %v83 = vld [vmem:[%s2] sm:$0x1]
    %v85 = vperm.slane %v83, 0
    %87 = vmatpush.msra.mxu0 %v82
    %88 = vmatpush.msra.mxu0 %v81
    %89 = vmatpush.msra.mxu0 %v80
    %90 = vmatpush.msra.mxu0 %v79
    %91 = vmatpush.msra.mxu0 %v78
    %92 = vmatpush.msra.mxu0 %v77
    %93 = vmatpush.msra.mxu0 %v76
    %94 = vmatpush.msra.mxu0 %v75
    %95 = vmatpush.msra.mxu0 %v74
    %96 = vmatpush.msra.mxu0 %v73
    %97 = vmatpush.msra.mxu0 %v72
    %98 = vmatpush.msra.mxu0 %v71
    %99 = vmatpush.msra.mxu0 %v70
    %100 = vmatpush.msra.mxu0 %v69
    %101 = vmatpush.msra.mxu0 %v68
    %102 = vmatpush.msra.mxu0 %v67
    %103 = vmatmul.f32.gmra.mxu0 %v66
    %v104 = vpop.f32.mrf.mxu0
    %v105 = vadd.f32 %v85, %v104
    %106 = vdwg.mxu0
    %v107 = vmax.f32 %v105, 0.0
    %v108 = vand.u32 2147483647, %v105
    %v109 = vsub.f32 0.0, %v108
    %v110 = vmul.f32 %v109, 1.442695
    %v111 = vpow.pop %v110
    %v112 = vadd.f32 %v111, 1.0
    %v113 = vlog2.pop %v112
    %v114 = vmul.f32 %v113, 0.6931472
    %v115 = vmul.f32 -0.5, %v111
    %v116 = vadd.f32 %v115, 1.0
    %v117 = vmul.f32 %v116, %v111
    %v118 = vand.u32 2147483647, %v111
    %vm119 = vcmp.lt.f32.partialorder %v118, 0.0004427343
    %v120 = vsel %vm119, %v117, %v114
    %v121 = vadd.f32 %v107, %v120
    %v122 = vtanh.pop %v121
    %v123 = vmul.f32 %v105, %v122
    %v124 = vld [vmem:[#allocation7] sm:$0xff]
    %v125 = vld [vmem:[#allocation7 + $0x8] sm:$0xff]
    %v126 = vld [vmem:[#allocation7 + $0x10] sm:$0xff]
    %v127 = vld [vmem:[#allocation7 + $0x18] sm:$0xff]
    %v128 = vld [vmem:[#allocation7 + $0x20] sm:$0xff]
    %v129 = vld [vmem:[#allocation7 + $0x28] sm:$0xff]
    %v130 = vld [vmem:[#allocation7 + $0x30] sm:$0xff]
    %v131 = vld [vmem:[#allocation7 + $0x38] sm:$0xff]
    %v132 = vld [vmem:[#allocation7 + $0x40] sm:$0xff]
    %v133 = vld [vmem:[#allocation7 + $0x48] sm:$0xff]
    %v134 = vld [vmem:[#allocation7 + $0x50] sm:$0xff]
    %v135 = vld [vmem:[#allocation7 + $0x58] sm:$0xff]
    %v136 = vld [vmem:[#allocation7 + $0x60] sm:$0xff]
    %v137 = vld [vmem:[#allocation7 + $0x68] sm:$0xff]
    %v138 = vld [vmem:[#allocation7 + $0x70] sm:$0xff]
    %v139 = vld [vmem:[#allocation7 + $0x78] sm:$0xff]
    %v140 = vld [vmem:[%s4] sm:$0x1]
    %v142 = vperm.slane %v140, 0
    %144 = vmatpush.msra.mxu0 %v139
    %145 = vmatpush.msra.mxu0 %v138
    %146 = vmatpush.msra.mxu0 %v137
    %147 = vmatpush.msra.mxu0 %v136
    %148 = vmatpush.msra.mxu0 %v135
    %149 = vmatpush.msra.mxu0 %v134
    %150 = vmatpush.msra.mxu0 %v133
    %151 = vmatpush.msra.mxu0 %v132
    %152 = vmatpush.msra.mxu0 %v131
    %153 = vmatpush.msra.mxu0 %v130
    %154 = vmatpush.msra.mxu0 %v129
    %155 = vmatpush.msra.mxu0 %v128
    %156 = vmatpush.msra.mxu0 %v127
    %157 = vmatpush.msra.mxu0 %v126
    %158 = vmatpush.msra.mxu0 %v125
    %159 = vmatpush.msra.mxu0 %v124
    %160 = vmatmul.f32.gmra.mxu0 %v123
    %v161 = vpop.f32.mrf.mxu0
    %v162 = vadd.f32 %v142, %v161
    %163 = vdwg.mxu0
    %164 = vst [vmem:[#allocation8] sm:$0x3] %v162
    // Predicated region
    $region34: #{tpu_custom_call.1} parent=1 // pred_check
      _
    $region35: #{tpu_custom_call.1} parent=1 // pred_check_branch
      %166 = sbr.rel (0) target = $region37
    $region36: #{tpu_custom_call.1} parent=1 // pred_region
      %168 = vsyncadd [#allocation4], 0
      %s170 = sshll.u32 [#allocation8], 4
      %s171 = int_to_ptr.vmem [resolvable:$true] %s170
      %s172 = sshll.u32 %s5, 4
      %s173 = int_to_ptr.hbm [resolvable:$true] %s172
      %175 = dma.vmem_to_hbm [thread:$0]  %s171, 32, %s173, [#allocation4]
    $region37: #{tpu_custom_call.1} parent=1 // pred_fallthru
      _
    // Predicated region
    $region38: #{tpu_custom_call.1} parent=1 // pred_check
      _
    $region39: #{tpu_custom_call.1} parent=1 // pred_check_branch
      %177 = sbr.rel (0) target = $region41
    $region40: #{tpu_custom_call.1} parent=1 // pred_region
      %179 = dma.done [#allocation4], 32
    $region41: #{tpu_custom_call.1} parent=1 // pred_fallthru
      _
    %180 = vsyncpa [#allocation3], 1
    %181 = vsyncpa [#allocation6], 1
    %182 = vsyncpa [#allocation4], 1

</llo_original>
